<compile_context>
chip_gen: v7x
topology: tpu7x:2x2x1
jax: 0.10.0
libtpu: 0.0.40
codegen_flags: <defaults>
</compile_context>

<pallas_src>
import math

import jax
import jax.numpy as jnp
from jax.experimental import pallas as pl
from jax.experimental.pallas import tpu as pltpu


def _sdp_proj_fused_kernel(x_ref, w_ref, b_ref, out_ref):
    """Fused QK input projection.

    x_ref   : (tm, E)   tile of flattened query rows
    w_ref   : (E, 2E)   pre-transposed [Wq^T | Wk^T], q-half pre-scaled
    b_ref   : (1, 2E)   bias, q-half pre-scaled
    out_ref : (tm, 2E)  [scaled-q | k] projection output
    """
    acc = jnp.dot(x_ref[...], w_ref[...], preferred_element_type=jnp.float32)
    out_ref[...] = (acc + b_ref[...]).astype(out_ref.dtype)


def scaled_dot_product_attention_proj(query, in_proj_weight, in_proj_bias):
    """query: (T, B, E); in_proj_weight: (2E, E); in_proj_bias: (2E,).

    Returns (q, k), each of shape (T, B, E), matching the PyTorch forward
    (q already multiplied by embed_dim ** -0.5).
    """
    T, B, E = query.shape
    assert in_proj_weight.shape == (2 * E, E)
    assert in_proj_bias.shape == (2 * E,)
    scaling = E ** (-0.5)

    M = T * B
    x = query.reshape(M, E)

    # Fuse + pre-transpose weights once in XLA (outside the kernel):
    #   F.linear(x, W, b) == x @ W.T + b ; W.T is (E, 2E) with q-cols first.
    # Fold the q scaling into the q-half of the weight and bias.
    scale_vec = jnp.concatenate(
        [jnp.full((E,), scaling, dtype=in_proj_weight.dtype),
         jnp.ones((E,), dtype=in_proj_weight.dtype)])
    w_fused = in_proj_weight.T * scale_vec[None, :]          # (E, 2E)
    b_fused = (in_proj_bias * scale_vec).reshape(1, 2 * E)   # (1, 2E)

    # Row tile: large block (512) when possible; otherwise the smallest
    # sublane-aligned block covering M.  Pad M up to a multiple of tm.
    tm = 512
    if M < tm:
        tm = max(8, ((M + 7) // 8) * 8)
    M_pad = ((M + tm - 1) // tm) * tm
    if M_pad != M:
        x = jnp.pad(x, ((0, M_pad - M), (0, 0)))

    grid = (M_pad // tm,)

    # VMEM budget: double-buffered x (tm,E) + out (tm,2E) + resident weights.
    itemsize = jnp.dtype(query.dtype).itemsize
    needed = (2 * tm * 3 * E * itemsize
              + 2 * (E * 2 * E + 2 * E) * jnp.dtype(w_fused.dtype).itemsize)
    vmem_limit = int(min(max(needed + (8 << 20), 32 << 20), 56 << 20))

    out_flat = pl.pallas_call(
        _sdp_proj_fused_kernel,
        out_shape=jax.ShapeDtypeStruct((M_pad, 2 * E), query.dtype),
        grid=grid,
        in_specs=[
            pl.BlockSpec((tm, E), lambda i: (i, 0)),       # x rows
            pl.BlockSpec((E, 2 * E), lambda i: (0, 0)),    # fused W^T
            pl.BlockSpec((1, 2 * E), lambda i: (0, 0)),    # fused bias
        ],
        out_specs=pl.BlockSpec((tm, 2 * E), lambda i: (i, 0)),
        compiler_params=pltpu.CompilerParams(
            dimension_semantics=("parallel",),
            vmem_limit_bytes=vmem_limit),
    )(x, w_fused, b_fused)

    out = out_flat[:M].reshape(T, B, 2 * E)
    q = out[..., :E]   # scaling already folded into weights/bias
    k = out[..., E:]
    return q, k


def _reference(query, in_proj_weight, in_proj_bias):
    """Plain-JAX reference mirroring the PyTorch forward."""
    E = query.shape[-1]
    proj = jnp.einsum("tbe,fe->tbf", query, in_proj_weight) + in_proj_bias
    q, k = proj[..., :E], proj[..., E:]
    return q * (E ** (-0.5)), k


if __name__ == "__main__":
    # Small shapes consistent with the module: (tgt_len, bsz, embed_dim)
    T, B, E = 8, 2, 32

    key = jax.random.PRNGKey(0)
    k_q, k_w, k_b = jax.random.split(key, 3)

    query = jax.random.normal(k_q, (T, B, E), dtype=jnp.float32)

    # Deterministic parameter init (xavier-uniform-like for weight, small
    # values for bias) — synthetic, not a checkpoint load.
    fan_in, fan_out = E, 2 * E
    bound = math.sqrt(6.0 / (fan_in + fan_out))
    in_proj_weight = jax.random.uniform(
        k_w, (2 * E, E), dtype=jnp.float32, minval=-bound, maxval=bound)
    in_proj_bias = 0.01 * jax.random.normal(k_b, (2 * E,), dtype=jnp.float32)

    q_out, k_out = scaled_dot_product_attention_proj(
        query, in_proj_weight, in_proj_bias)
    q_out = jax.block_until_ready(q_out)
    k_out = jax.block_until_ready(k_out)

    q_ref, k_ref = _reference(query, in_proj_weight, in_proj_bias)
    assert q_out.shape == (T, B, E) and k_out.shape == (T, B, E)
    assert jnp.allclose(q_out, q_ref, atol=1e-5, rtol=1e-5)
    assert jnp.allclose(k_out, k_ref, atol=1e-5, rtol=1e-5)

    print("KERNEL_OK")
</pallas_src>

<mosaic_0001>
module attributes {stable_mosaic.version = 11 : i64} {
  func.func @_sdp_proj_fused_kernel(%arg0: i32, %arg1: memref<16x32xf32, #tpu.memory_space<vmem>>, %arg2: memref<32x64xf32, #tpu.memory_space<vmem>>, %arg3: memref<1x64xf32, #tpu.memory_space<vmem>>, %arg4: memref<16x64xf32, #tpu.memory_space<vmem>>) attributes {dimension_semantics = [#tpu.dimension_semantics<parallel>], iteration_bounds = array<i64: 1>, scalar_prefetch = 0 : i64, scratch_operands = 0 : i64, tpu.core_type = #tpu.core_type<tc>, window_params = [{transform_indices = @transform_0, window_bounds = array<i64: 16, 32>}, {pipeline_mode = #tpu.pipeline_mode<synchronous>, transform_indices = @transform_1, window_bounds = array<i64: 32, 64>}, {pipeline_mode = #tpu.pipeline_mode<synchronous>, transform_indices = @transform_2, window_bounds = array<i64: 1, 64>}, {transform_indices = @transform_3, window_bounds = array<i64: 16, 64>}]} {
    %c0 = arith.constant 0 : index
    %c0_0 = arith.constant 0 : index
    %0 = vector.load %arg1[%c0, %c0_0] : memref<16x32xf32, #tpu.memory_space<vmem>>, vector<16x32xf32>
    %c0_1 = arith.constant 0 : index
    %c0_2 = arith.constant 0 : index
    %1 = vector.load %arg2[%c0_1, %c0_2] : memref<32x64xf32, #tpu.memory_space<vmem>>, vector<32x64xf32>
    %cst = arith.constant dense<0.000000e+00> : vector<16x64xf32>
    %2 = tpu.matmul %0, %1, %cst {dimension_numbers = #tpu.dot_dimension_numbers<[1], [0], [0], [1], [0, 0, 1, 1], [], []>} : vector<16x32xf32>, vector<32x64xf32>, vector<16x64xf32> -> vector<16x64xf32>
    %c0_3 = arith.constant 0 : index
    %c0_4 = arith.constant 0 : index
    %3 = vector.load %arg3[%c0_3, %c0_4] : memref<1x64xf32, #tpu.memory_space<vmem>>, vector<1x64xf32>
    %4 = vector.broadcast %3 : vector<1x64xf32> to vector<16x64xf32>
    %5 = arith.addf %2, %4 : vector<16x64xf32>
    %c0_5 = arith.constant 0 : index
    %c0_6 = arith.constant 0 : index
    %6 = vector.load %arg4[%c0_5, %c0_6] : memref<16x64xf32, #tpu.memory_space<vmem>>, vector<16x64xf32>
    tpu.vector_store %arg4[%c0_5, %c0_6], %5 {strides = array<i32>} : memref<16x64xf32, #tpu.memory_space<vmem>>, vector<16x64xf32>,
    return
  }
  func.func @transform_0(%arg0: i32) -> (i32, i32) {
    %c0_i32 = arith.constant 0 : i32
    %c0_i32_0 = arith.constant 0 : i32
    return %arg0, %c0_i32 : i32, i32
  }
  func.func @transform_1(%arg0: i32) -> (i32, i32) {
    %c0_i32 = arith.constant 0 : i32
    %c0_i32_0 = arith.constant 0 : i32
    %c0_i32_1 = arith.constant 0 : i32
    return %c0_i32, %c0_i32_0 : i32, i32
  }
  func.func @transform_2(%arg0: i32) -> (i32, i32) {
    %c0_i32 = arith.constant 0 : i32
    %c0_i32_0 = arith.constant 0 : i32
    %c0_i32_1 = arith.constant 0 : i32
    return %c0_i32, %c0_i32_0 : i32, i32
  }
  func.func @transform_3(%arg0: i32) -> (i32, i32) {
    %c0_i32 = arith.constant 0 : i32
    %c0_i32_0 = arith.constant 0 : i32
    return %arg0, %c0_i32 : i32, i32
  }
}

</mosaic_0001>

<llo_original>
// kernel: tpu_custom_call.1
$region0: #{tpu_custom_call.1}
  #allocation0 [shape = 'u32[]', space=smem, size = 0x4, offset = 0x4, fixed_abs, tag = 'smem constant byte address 0x4 - core index']
  #allocation1 [shape = 'u32[144,128]{1,0:T(1,128)}', space=vmem, size = 0x12000, scoped, tag = 'internal scratch']
  %s0 = inlined_call_operand.hbm [shape: f32[16,32], index: 0, kind: input, shape index: {}]
  %s1 = inlined_call_operand.hbm [shape: f32[32,64], index: 1, kind: input, shape index: {}]
  %s2 = inlined_call_operand.vmem [shape: f32[1,64], index: 2, kind: input, shape index: {}]
  %s3 = inlined_call_operand.hbm [shape: f32[16,64], index: 3, kind: output, shape index: {}]
  %s4 = sld [smem:[#allocation0]]
  $region30: #{tpu_custom_call.1} parent=0
    _
  %s6 = ssub.s32 1, %s4
  %s7 = scalar_select 0, %s6, %s4
  $region1: #{tpu_custom_call.1} parent=0
    #allocation2 [shape = 'u8[8192]{0}', space=vmem, size = 0x2000, scoped, tag = 'input window, operand 0, single buffered']
    #allocation3 [shape = 's32[1]{0}', space=sflag, size = 0x4, scoped, tag = 'scoped memory for tpu_custom_call.1']
    #allocation4 [shape = 's32[1]{0}', space=sflag, size = 0x4, scoped, tag = 'scoped memory for tpu_custom_call.1']
    #allocation5 [shape = 'u8[16384]{0}', space=vmem, size = 0x4000, scoped, tag = 'input window, operand 1, single buffered']
    #allocation6 [shape = 's32[1]{0}', space=sflag, size = 0x4, scoped, tag = 'scoped memory for tpu_custom_call.1']
    #allocation7 [shape = 'u8[8192]{0}', space=vmem, size = 0x2000, scoped, tag = 'output window, operand 0, single buffered']
    %8 = vsyncpa [#allocation3], 0
    %9 = vsyncpa [#allocation6], 0
    %10 = vsyncpa [#allocation4], 0
    // Predicated region
    $region2: #{tpu_custom_call.1} parent=1 // pred_check
      _
    $region3: #{tpu_custom_call.1} parent=1 // pred_check_branch
      %12 = sbr.rel (0) target = $region5
    $region4: #{tpu_custom_call.1} parent=1 // pred_region
      %s14 = ssub.s32 256, 256
      %15 = vsyncadd [#allocation3], %s14
      %s16 = sshll.u32 [#allocation2], 4
      %s17 = int_to_ptr.vmem [resolvable:$true] %s16
      %22 = dma.hbm_to_vmem [thread:$0]  %s0, 256, %s17, [#allocation3], 128, 128, 8
    $region5: #{tpu_custom_call.1} parent=1 // pred_fallthru
      _
    // Predicated region
    $region6: #{tpu_custom_call.1} parent=1 // pred_check
      _
    $region7: #{tpu_custom_call.1} parent=1 // pred_check_branch
      %24 = sbr.rel (0) target = $region9
    $region8: #{tpu_custom_call.1} parent=1 // pred_region
      %s26 = ssub.s32 512, 512
      %27 = vsyncadd [#allocation6], %s26
      %s28 = sshll.u32 [#allocation5], 4
      %s29 = int_to_ptr.vmem [resolvable:$true] %s28
      %34 = dma.hbm_to_vmem [thread:$0]  %s1, 512, %s29, [#allocation6], 128, 128, 8
    $region9: #{tpu_custom_call.1} parent=1 // pred_fallthru
      _
    // Predicated region
    $region10: #{tpu_custom_call.1} parent=1 // pred_check
      _
    $region11: #{tpu_custom_call.1} parent=1 // pred_check_branch
      %36 = sbr.rel (0) target = $region13
    $region12: #{tpu_custom_call.1} parent=1 // pred_region
      _
    $region13: #{tpu_custom_call.1} parent=1 // pred_fallthru
      _
    // Predicated region
    $region14: #{tpu_custom_call.1} parent=1 // pred_check
      _
    $region15: #{tpu_custom_call.1} parent=1 // pred_check_branch
      %38 = sbr.rel (0) target = $region17
    $region16: #{tpu_custom_call.1} parent=1 // pred_region
      %39 = dma.done [#allocation3], 256
    $region17: #{tpu_custom_call.1} parent=1 // pred_fallthru
      _
    // Predicated region
    $region18: #{tpu_custom_call.1} parent=1 // pred_check
      _
    $region19: #{tpu_custom_call.1} parent=1 // pred_check_branch
      %41 = sbr.rel (0) target = $region21
    $region20: #{tpu_custom_call.1} parent=1 // pred_region
      %42 = dma.done [#allocation6], 512
    $region21: #{tpu_custom_call.1} parent=1 // pred_fallthru
      _
    %v43 = vld [vmem:[#allocation2] sm:$0xff]
    %v44 = vld [vmem:[#allocation2 + $0x8] sm:$0xff]
    %v45 = vld [vmem:[#allocation5] sm:$0xff]
    %v46 = vld [vmem:[#allocation5 + $0x8] sm:$0xff]
    %v47 = vld [vmem:[#allocation5 + $0x10] sm:$0xff]
    %v48 = vld [vmem:[#allocation5 + $0x18] sm:$0xff]
    %v49 = vld [vmem:[%s2] sm:$0x1]
    %v51 = vlaneseq
    %v52 = vshrl.u32 %v51, 7
    %v53 = vsub.s32 0, %v52
    %v54 = vrot.slane %v49, %v53
    %vm56 = vcmask 261120
    %v58 = vsel %vm56, %v43, 0
    %v61 = vsel %vm56, %v44, 0
    %63 = vmatprep.subr.mxu0 0.0
    %64 = vmatpush1.msra.mxu0 %v45
    %65 = vmatprep.subr.mxu0 0.0
    %66 = vmatpush1.msra.mxu0 %v46
    %67 = vmatprep.subr.mxu0 0.0
    %68 = vmatpush1.msra.mxu0 %v47
    %69 = vmatprep.subr.mxu0 0.0
    %70 = vmatpush1.msra.mxu0 %v48
    %71 = vmatprep.subr.mxu0 0.0
    %72 = vmatpush1.msra.mxu0 0.0
    %73 = vmatprep.subr.mxu0 0.0
    %74 = vmatpush1.msra.mxu0 0.0
    %75 = vmatprep.subr.mxu0 0.0
    %76 = vmatpush1.msra.mxu0 0.0
    %77 = vmatprep.subr.mxu0 0.0
    %78 = vmatpush1.msra.mxu0 0.0
    %79 = vmatprep.subr.mxu0 0.0
    %80 = vmatpush1.msra.mxu0 0.0
    %81 = vmatprep.subr.mxu0 0.0
    %82 = vmatpush1.msra.mxu0 0.0
    %83 = vmatprep.subr.mxu0 0.0
    %84 = vmatpush1.msra.mxu0 0.0
    %85 = vmatprep.subr.mxu0 0.0
    %86 = vmatpush1.msra.mxu0 0.0
    %87 = vmatprep.subr.mxu0 0.0
    %88 = vmatpush1.msra.mxu0 0.0
    %89 = vmatprep.subr.mxu0 0.0
    %90 = vmatpush1.msra.mxu0 0.0
    %91 = vmatprep.subr.mxu0 0.0
    %92 = vmatpush1.msra.mxu0 0.0
    %93 = vmatprep.subr.mxu0 0.0
    %94 = vmatpush1.msra.mxu0 0.0
    %95 = vmatprep.subr.mxu0 0.0
    %96 = vmatpush1.msra.mxu0 0.0
    %97 = vmatprep.subr.mxu0 0.0
    %98 = vmatpush1.msra.mxu0 0.0
    %99 = vmatprep.subr.mxu0 0.0
    %100 = vmatpush1.msra.mxu0 0.0
    %101 = vmatprep.subr.mxu0 0.0
    %102 = vmatpush1.msra.mxu0 0.0
    %103 = vmatprep.subr.mxu0 0.0
    %104 = vmatpush1.msra.mxu0 0.0
    %105 = vmatprep.subr.mxu0 0.0
    %106 = vmatpush1.msra.mxu0 0.0
    %107 = vmatprep.subr.mxu0 0.0
    %108 = vmatpush1.msra.mxu0 0.0
    %109 = vmatprep.subr.mxu0 0.0
    %110 = vmatpush1.msra.mxu0 0.0
    %111 = vmatprep.subr.mxu0 0.0
    %112 = vmatpush1.msra.mxu0 0.0
    %113 = vmatprep.subr.mxu0 0.0
    %114 = vmatpush1.msra.mxu0 0.0
    %115 = vmatprep.subr.mxu0 0.0
    %116 = vmatpush1.msra.mxu0 0.0
    %117 = vmatprep.subr.mxu0 0.0
    %118 = vmatpush1.msra.mxu0 0.0
    %119 = vmatprep.subr.mxu0 0.0
    %120 = vmatpush1.msra.mxu0 0.0
    %121 = vmatprep.subr.mxu0 0.0
    %122 = vmatpush1.msra.mxu0 0.0
    %123 = vmatprep.subr.mxu0 0.0
    %124 = vmatpush1.msra.mxu0 0.0
    %125 = vmatprep.subr.mxu0 0.0
    %126 = vmatpush1.msra.mxu0 0.0
    %127 = vmatprep.mubr.f32.mxu0 0.0
    %128 = vmatmul.mubr.f32.gmra.mrb[0].mxu0 %v58
    %v129 = vpop.f32.mrb[0].mxu0
    %v130 = vadd.f32 %v54, %v129
    %v131 = vpop.f32.mrb[0].mxu0
    %132 = vmatprep.mubr.f32.mxu0 0.0
    %133 = vmatmul.mubr.f32.gmra.mrb[0].mxu0 %v61
    %v134 = vpop.f32.mrb[0].mxu0
    %v135 = vadd.f32 %v54, %v134
    %v136 = vpop.f32.mrb[0].mxu0
    %137 = vdwg.mxu0
    %vm138 = vcmask 523264
    %139 = vst.msk [vmem:[#allocation7] sm:$0xff] %vm138, %v130
    %140 = vst.msk [vmem:[#allocation7 + $0x8] sm:$0xff] %vm138, %v135
    // Predicated region
    $region22: #{tpu_custom_call.1} parent=1 // pred_check
      _
    $region23: #{tpu_custom_call.1} parent=1 // pred_check_branch
      %142 = sbr.rel (0) target = $region25
    $region24: #{tpu_custom_call.1} parent=1 // pred_region
      %s144 = ssub.s32 256, 256
      %145 = vsyncadd [#allocation4], %s144
      %s146 = sshll.u32 [#allocation7], 4
      %s147 = int_to_ptr.vmem [resolvable:$true] %s146
      %152 = dma.vmem_to_hbm [thread:$0]  %s147, 256, %s3, [#allocation4], 128, 128, 8
    $region25: #{tpu_custom_call.1} parent=1 // pred_fallthru
      _
    // Predicated region
    $region26: #{tpu_custom_call.1} parent=1 // pred_check
      _
    $region27: #{tpu_custom_call.1} parent=1 // pred_check_branch
      %154 = sbr.rel (0) target = $region29
    $region28: #{tpu_custom_call.1} parent=1 // pred_region
      %155 = dma.done [#allocation4], 256
    $region29: #{tpu_custom_call.1} parent=1 // pred_fallthru
      _
    %156 = vsyncpa [#allocation3], 1
    %157 = vsyncpa [#allocation6], 1
    %158 = vsyncpa [#allocation4], 1

</llo_original>
